<compile_context>
chip_gen: v5e
topology: v5e:2x2
jax: 0.10.0
libtpu: 0.0.40
codegen_flags: <defaults>
</compile_context>

<pallas_src>
import functools

import jax
import jax.numpy as jnp
from jax import lax
from jax.experimental import pallas as pl
from jax.experimental.pallas import tpu as pltpu


def _round_up(a: int, b: int) -> int:
    return ((a + b - 1) // b) * b


def _cdiv(a: int, b: int) -> int:
    return -(-a // b)


def _vmem_capacity_bytes() -> int:
    """Physical per-core VMEM; conservative (v7x) fallback if the query fails."""
    try:
        cap = getattr(pltpu.get_tpu_info(), "vmem_capacity_bytes", None)
        if cap:
            return int(cap)
    except Exception:
        pass
    return 64 * 1024 * 1024


def _dimension_semantics(num_tiles: int):
    """Use CORE_PARALLEL on multi-TensorCore chips (v7x) when there are >=2 tiles."""
    try:
        kind = jax.devices()[0].device_kind.lower()
    except Exception:
        kind = ""
    if num_tiles >= 2 and "v7" in kind:
        return (pltpu.CORE_PARALLEL,)
    return ("parallel",)


def _kldiv_kernel(inp_ref, tgt_ref, o_ref, *, lane_groups, tg, need_mask):
    # Blocks are (N, tg, 128): the softmax axis N stays whole (leading dim, cheap
    # VPU reduce) and the (tg, 128) slab per n is fully (8,128)-dense.
    x = inp_ref[...].astype(jnp.float32)
    t = tgt_ref[...].astype(jnp.float32)

    if need_mask:
        # Ragged last tile: out-of-range 128-lane groups read garbage. Zeroing
        # BOTH tensors makes those columns uniform -> exact 0 KL contribution.
        grp = pl.program_id(0) * tg + lax.broadcasted_iota(jnp.int32, x.shape, 1)
        valid = grp < lane_groups
        x = jnp.where(valid, x, 0.0)
        t = jnp.where(valid, t, 0.0)

    x_sh = x - jnp.max(x, axis=0, keepdims=True)
    t_sh = t - jnp.max(t, axis=0, keepdims=True)
    exp_x = jnp.exp(x_sh)
    sum_exp_x = jnp.sum(exp_x, axis=0, keepdims=True)            # (1, tg, 128)
    sum_exp_t = jnp.sum(jnp.exp(t_sh), axis=0, keepdims=True)    # (1, tg, 128)

    # sum_n p_n * (log p_n - log q_n)
    #   = [sum_n exp(xs_n) * (xs_n - ts_n)] / Sx  -  log Sx  +  log St
    # (uses sum_n p_n == 1; drops the full-size log_p / p / log_q / kl arrays)
    num = jnp.sum(exp_x * (x_sh - t_sh), axis=0, keepdims=True)  # (1, tg, 128)
    kl = (num * pl.reciprocal(sum_exp_x, approx=False)
          - jnp.log(sum_exp_x) + jnp.log(sum_exp_t))             # (1, tg, 128)

    o_ref[...] = jnp.sum(kl, axis=1, keepdims=True)              # (1, 1, 128)


@jax.jit
def kldiv_loss_func(inp, target):
    """Pallas equivalent of KLDivLossFunc.forward(inp, target). Returns a scalar f32."""
    assert inp.shape == target.shape and inp.ndim >= 2, "expected NxHxW tensors"
    n = inp.shape[0]
    x = inp.reshape(n, -1)
    t = target.reshape(n, -1)
    hw = x.shape[1]

    # Zero-pad only to the 128-lane boundary (never to a full tile); padded
    # columns are uniform in both tensors and contribute exactly 0 to the KL sum.
    lane_hw = _round_up(hw, 128)
    if lane_hw != hw:
        x = jnp.pad(x, ((0, 0), (0, lane_hw - hw)))
        t = jnp.pad(t, ((0, 0), (0, lane_hw - hw)))
    lane_groups = lane_hw // 128

    # Lane-dense 3-D view (free reshape of contiguous data): (N, lane_groups, 128).
    x = x.reshape(n, lane_groups, 128)
    t = t.reshape(n, lane_groups, 128)

    itemsize = max(jnp.dtype(inp.dtype).itemsize, jnp.dtype(target.dtype).itemsize)

    # ---- tile size (in 128-lane groups) from a per-generation VMEM budget ----
    vmem_cap = _vmem_capacity_bytes()
    vmem_limit = (vmem_cap * 2) // 3            # ~85 MiB v5e/v6e, ~42 MiB v7x
    block_budget = (vmem_limit * 3) // 5        # headroom for Mosaic scratch
    # Per 128-lane group: 2 inputs x 2 pipeline buffers + ~8 full f32 temps
    # + a handful of (1, tg, 128) f32 reductions.
    bytes_per_group = n * 128 * (4 * itemsize + 8 * 4) + 6 * 128 * 4
    tg_budget = max(8, (block_budget // bytes_per_group) // 8 * 8)

    min_split_tg = 512                          # 64K lanes: per-step overhead ~nil
    if lane_groups <= tg_budget:
        if lane_groups >= 4 * min_split_tg:
            tg = _round_up(_cdiv(lane_groups, 4), 8)   # >=4 tiles: pipelining + 2 TCs
        elif lane_groups >= 2 * min_split_tg:
            tg = _round_up(_cdiv(lane_groups, 2), 8)
        else:
            tg = lane_groups                            # tiny problem: single block
    else:
        tg = tg_budget
    num_tiles = _cdiv(lane_groups, tg)
    need_mask = (lane_groups % tg) != 0

    cost = pl.CostEstimate(
        flops=12 * n * lane_hw + 6 * lane_hw,
        transcendentals=2 * n * lane_hw + 3 * lane_hw,
        bytes_accessed=2 * n * lane_hw * itemsize + num_tiles * 128 * 4,
    )

    kernel = functools.partial(
        _kldiv_kernel, lane_groups=lane_groups, tg=tg, need_mask=need_mask)

    partials = pl.pallas_call(
        kernel,
        out_shape=jax.ShapeDtypeStruct((num_tiles, 1, 128), jnp.float32),
        grid=(num_tiles,),
        in_specs=[
            pl.BlockSpec((n, tg, 128), lambda i: (0, i, 0)),
            pl.BlockSpec((n, tg, 128), lambda i: (0, i, 0)),
        ],
        out_specs=pl.BlockSpec((1, 1, 128), lambda i: (i, 0, 0)),
        compiler_params=pltpu.CompilerParams(
            dimension_semantics=_dimension_semantics(num_tiles),
            vmem_limit_bytes=int(vmem_limit),
        ),
        cost_estimate=cost,
    )(x, t)

    # batchmean: divide by N (the softmax axis, matching the PyTorch call).
    return jnp.sum(partials) / jnp.float32(n)


def _kldiv_ref(inp, target):
    # Pure-JAX reference mirroring the PyTorch forward (explicit .float() cast).
    x = inp.astype(jnp.float32)
    t = target.astype(jnp.float32)
    p = jax.nn.softmax(x, axis=0)
    log_q = jax.nn.log_softmax(t, axis=0)
    return jnp.sum(p * (jnp.log(p) - log_q)) / x.shape[0]


if __name__ == "__main__":
    key = jax.random.PRNGKey(0)
    k1, k2 = jax.random.split(key)

    # Check 1: bf16 inputs (caller-side bf16 halves HBM traffic; math stays f32).
    N, H, W = 2, 16, 16
    inp = jax.random.normal(k1, (N, H, W), dtype=jnp.float32).astype(jnp.bfloat16)
    target = jax.random.normal(k2, (N, H, W), dtype=jnp.float32).astype(jnp.bfloat16)
    loss = kldiv_loss_func(inp, target)
    jax.block_until_ready(loss)
    ref = _kldiv_ref(inp, target)
    assert jnp.allclose(loss, ref, rtol=1e-4, atol=1e-5), (loss, ref)

    # Check 2: f32 inputs with a non-128-multiple spatial size (lane-pad path).
    N2, H2, W2 = 2, 10, 20
    inp2 = jax.random.normal(jax.random.PRNGKey(1), (N2, H2, W2), dtype=jnp.float32)
    tgt2 = jax.random.normal(jax.random.PRNGKey(2), (N2, H2, W2), dtype=jnp.float32)
    loss2 = kldiv_loss_func(inp2, tgt2)
    jax.block_until_ready(loss2)
    ref2 = _kldiv_ref(inp2, tgt2)
    assert jnp.allclose(loss2, ref2, rtol=1e-4, atol=1e-5), (loss2, ref2)

    # TODO(synk): KLDivLossFunc.loss_to_normal (static VAE helper) is not part of
    # forward() and is not translated here; beta_value is unused in forward().
    print("KERNEL_OK")
</pallas_src>

<mosaic_0001>
module attributes {stable_mosaic.version = 11 : i64} {
  func.func @_kldiv_kernel(%arg0: i32, %arg1: memref<2x2x128xbf16, #tpu.memory_space<vmem>>, %arg2: memref<2x2x128xbf16, #tpu.memory_space<vmem>>, %arg3: memref<1x1x128xf32, #tpu.memory_space<vmem>>) attributes {dimension_semantics = [#tpu.dimension_semantics<parallel>], iteration_bounds = array<i64: 1>, scalar_prefetch = 0 : i64, scratch_operands = 0 : i64, tpu.core_type = #tpu.core_type<tc>, window_params = [{transform_indices = @transform_0, window_bounds = array<i64: 2, 2, 128>}, {transform_indices = @transform_1, window_bounds = array<i64: 2, 2, 128>}, {transform_indices = @transform_2, window_bounds = array<i64: 1, 1, 128>}]} {
    %c0 = arith.constant 0 : index
    %c0_0 = arith.constant 0 : index
    %c0_1 = arith.constant 0 : index
    %0 = vector.load %arg1[%c0, %c0_0, %c0_1] : memref<2x2x128xbf16, #tpu.memory_space<vmem>>, vector<2x2x128xbf16>
    %1 = arith.extf %0 : vector<2x2x128xbf16> to vector<2x2x128xf32>
    %c0_2 = arith.constant 0 : index
    %c0_3 = arith.constant 0 : index
    %c0_4 = arith.constant 0 : index
    %2 = vector.load %arg2[%c0_2, %c0_3, %c0_4] : memref<2x2x128xbf16, #tpu.memory_space<vmem>>, vector<2x2x128xbf16>
    %3 = arith.extf %2 : vector<2x2x128xbf16> to vector<2x2x128xf32>
    %cst = arith.constant dense<0xFF800000> : vector<2x128xf32>
    %4 = vector.multi_reduction <maximumf>, %1, %cst [0] : vector<2x2x128xf32> to vector<2x128xf32>
    %5 = vector.shape_cast %4 : vector<2x128xf32> to vector<1x2x128xf32>
    %6 = vector.broadcast %5 : vector<1x2x128xf32> to vector<2x2x128xf32>
    %7 = arith.subf %1, %6 : vector<2x2x128xf32>
    %cst_5 = arith.constant dense<0xFF800000> : vector<2x128xf32>
    %8 = vector.multi_reduction <maximumf>, %3, %cst_5 [0] : vector<2x2x128xf32> to vector<2x128xf32>
    %9 = vector.shape_cast %8 : vector<2x128xf32> to vector<1x2x128xf32>
    %10 = vector.broadcast %9 : vector<1x2x128xf32> to vector<2x2x128xf32>
    %11 = arith.subf %3, %10 : vector<2x2x128xf32>
    %12 = math.exp %7 : vector<2x2x128xf32>
    %cst_6 = arith.constant dense<0.000000e+00> : vector<2x128xf32>
    %13 = vector.multi_reduction <add>, %12, %cst_6 [0] : vector<2x2x128xf32> to vector<2x128xf32>
    %14 = vector.shape_cast %13 : vector<2x128xf32> to vector<1x2x128xf32>
    %15 = math.exp %11 : vector<2x2x128xf32>
    %cst_7 = arith.constant dense<0.000000e+00> : vector<2x128xf32>
    %16 = vector.multi_reduction <add>, %15, %cst_7 [0] : vector<2x2x128xf32> to vector<2x128xf32>
    %17 = vector.shape_cast %16 : vector<2x128xf32> to vector<1x2x128xf32>
    %18 = arith.subf %7, %11 : vector<2x2x128xf32>
    %19 = arith.mulf %12, %18 : vector<2x2x128xf32>
    %cst_8 = arith.constant dense<0.000000e+00> : vector<2x128xf32>
    %20 = vector.multi_reduction <add>, %19, %cst_8 [0] : vector<2x2x128xf32> to vector<2x128xf32>
    %21 = vector.shape_cast %20 : vector<2x128xf32> to vector<1x2x128xf32>
    %22 = tpu.reciprocal %14 : vector<1x2x128xf32> -> vector<1x2x128xf32>
    %23 = arith.mulf %21, %22 : vector<1x2x128xf32>
    %24 = math.log %14 : vector<1x2x128xf32>
    %25 = arith.subf %23, %24 : vector<1x2x128xf32>
    %26 = math.log %17 : vector<1x2x128xf32>
    %27 = arith.addf %25, %26 : vector<1x2x128xf32>
    %cst_9 = arith.constant dense<0.000000e+00> : vector<1x128xf32>
    %28 = vector.multi_reduction <add>, %27, %cst_9 [1] : vector<1x2x128xf32> to vector<1x128xf32>
    %29 = vector.shape_cast %28 : vector<1x128xf32> to vector<1x1x128xf32>
    %c0_10 = arith.constant 0 : index
    %c0_11 = arith.constant 0 : index
    %c0_12 = arith.constant 0 : index
    %30 = vector.load %arg3[%c0_10, %c0_11, %c0_12] : memref<1x1x128xf32, #tpu.memory_space<vmem>>, vector<1x1x128xf32>
    tpu.vector_store %arg3[%c0_10, %c0_11, %c0_12], %29 {strides = array<i32>} : memref<1x1x128xf32, #tpu.memory_space<vmem>>, vector<1x1x128xf32>,
    return
  }
  func.func @transform_0(%arg0: i32) -> (i32, i32, i32) {
    %c0_i32 = arith.constant 0 : i32
    %c0_i32_0 = arith.constant 0 : i32
    %c0_i32_1 = arith.constant 0 : i32
    return %c0_i32, %arg0, %c0_i32_0 : i32, i32, i32
  }
  func.func @transform_1(%arg0: i32) -> (i32, i32, i32) {
    %c0_i32 = arith.constant 0 : i32
    %c0_i32_0 = arith.constant 0 : i32
    %c0_i32_1 = arith.constant 0 : i32
    return %c0_i32, %arg0, %c0_i32_0 : i32, i32, i32
  }
  func.func @transform_2(%arg0: i32) -> (i32, i32, i32) {
    %c0_i32 = arith.constant 0 : i32
    %c0_i32_0 = arith.constant 0 : i32
    %c0_i32_1 = arith.constant 0 : i32
    return %arg0, %c0_i32, %c0_i32_0 : i32, i32, i32
  }
}

</mosaic_0001>

<llo_original>
// kernel: kldiv_loss_func.1
$region0: #{kldiv_loss_func.1}
  #allocation0 [shape = 'u32[]', space=smem, size = 0x4, offset = 0x4, fixed_abs, tag = 'smem constant byte address 0x4 - core index']
  #allocation1 [shape = 'u32[72,128]{1,0:T(1,128)}', space=vmem, size = 0x9000, scoped, tag = 'internal scratch']
  %s0 = inlined_call_operand.vmem [shape: bf16[2,2,128], index: 0, kind: input, shape index: {}]
  %s1 = inlined_call_operand.vmem [shape: bf16[2,2,128], index: 1, kind: input, shape index: {}]
  %s2 = inlined_call_operand.vmem [shape: f32[1,1,128], index: 2, kind: output, shape index: {}]
  %s3 = sld [smem:[#allocation0]]
  $region18: #{kldiv_loss_func.1} parent=0
    _
  %s5 = ssub.s32 1, %s3
  %s6 = scalar_select 0, %s5, %s3
  // Predicated region
  $region2: #{kldiv_loss_func.1} parent=0 // pred_check
    _
  $region3: #{kldiv_loss_func.1} parent=0 // pred_check_branch
    %8 = sbr.rel (0) target = $region5
  $region4: #{kldiv_loss_func.1} parent=0 // pred_region
    _
  $region5: #{kldiv_loss_func.1} parent=0 // pred_fallthru
    _
  // Predicated region
  $region6: #{kldiv_loss_func.1} parent=0 // pred_check
    _
  $region7: #{kldiv_loss_func.1} parent=0 // pred_check_branch
    %10 = sbr.rel (0) target = $region9
  $region8: #{kldiv_loss_func.1} parent=0 // pred_region
    _
  $region9: #{kldiv_loss_func.1} parent=0 // pred_fallthru
    _
  %v11 = vld [vmem:[%s0] sm:$0x1]
  %v12 = vld [vmem:[%s0 + $0x1] sm:$0x1]
  %v13 = vunpack.c.l.bf16 %v11
  %v14 = vunpack.c.l.bf16 %v12
  %v15 = vld [vmem:[%s1] sm:$0x1]
  %v16 = vld [vmem:[%s1 + $0x1] sm:$0x1]
  %v17 = vunpack.c.l.bf16 %v15
  %v18 = vunpack.c.l.bf16 %v16
  %vm19 = vcmask 1041408
  %v20 = vsel %vm19, %v13, -inf
  %v21 = vsel %vm19, %v14, -inf
  %v22 = vmax.f32 %v20, %v21
  %v23 = vsub.f32 %v13, %v22
  %v24 = vsub.f32 %v14, %v22
  %v25 = vsel %vm19, %v17, -inf
  %v26 = vsel %vm19, %v18, -inf
  %v27 = vmax.f32 %v25, %v26
  %v28 = vsub.f32 %v17, %v27
  %v29 = vsub.f32 %v18, %v27
  %v30 = vmul.f32 %v23, 1.442695
  %v31 = vpow.pop %v30
  %v32 = vmul.f32 %v24, 1.442695
  %v33 = vpow.pop %v32
  %v34 = vsel %vm19, %v31, 0.0
  %v35 = vsel %vm19, %v33, 0.0
  %v36 = vadd.f32 %v34, %v35
  %v37 = vmul.f32 %v28, 1.442695
  %v38 = vpow.pop %v37
  %v39 = vmul.f32 %v29, 1.442695
  %v40 = vpow.pop %v39
  %v41 = vsel %vm19, %v38, 0.0
  %v42 = vsel %vm19, %v40, 0.0
  %v43 = vadd.f32 %v41, %v42
  %v44 = vsub.f32 %v23, %v28
  %v45 = vsub.f32 %v24, %v29
  %v46 = vmul.f32 %v31, %v44
  %v47 = vmul.f32 %v33, %v45
  %v48 = vsel %vm19, %v46, 0.0
  %v49 = vsel %vm19, %v47, 0.0
  %v50 = vadd.f32 %v48, %v49
  %v51 = vrcp.pop %v36
  %v52 = vmul.f32 %v36, %v51
  %v53 = vsub.f32 1.0, %v52
  %v54 = vmul.f32 %v51, %v53
  %v55 = vadd.f32 %v51, %v54
  %vm56 = vweird.f32 %v36
  %vm57 = vweird.f32 %v51
  %vm58 = vmor %vm56, %vm57
  %v59 = vsel %vm58, %v51, %v55
  %v60 = vand.u32 2147483647, %v36
  %vm61 = vcmp.eq.f32.partialorder %v60, 8.507059e+37
  %v62 = vand.u32 %v36, 2147483648
  %v63 = vor.u32 1.1754944e-38, %v62
  %v64 = vsel %vm61, %v63, %v59
  %v65 = vmul.f32 %v50, %v64
  %v66 = vlog2.pop %v36
  %v67 = vmul.f32 %v66, 0.6931472
  %v68 = vsub.f32 %v65, %v67
  %v69 = vlog2.pop %v43
  %v70 = vmul.f32 %v69, 0.6931472
  %v71 = vadd.f32 %v68, %v70
  %v72 = vsel %vm19, %v71, 0.0
  %v73 = vrot.slane %v72, 4
  %v74 = vadd.f32 %v72, %v73
  %v75 = vrot.slane %v74, 2
  %v76 = vadd.f32 %v74, %v75
  %v77 = vrot.slane %v76, 1
  %v78 = vadd.f32 %v76, %v77
  %79 = vst [vmem:[%s2] sm:$0x1] %v78
  // Predicated region
  $region10: #{kldiv_loss_func.1} parent=0 // pred_check
    _
  $region11: #{kldiv_loss_func.1} parent=0 // pred_check_branch
    %81 = sbr.rel (0) target = $region13
  $region12: #{kldiv_loss_func.1} parent=0 // pred_region
    _
  $region13: #{kldiv_loss_func.1} parent=0 // pred_fallthru
    _
  // Predicated region
  $region14: #{kldiv_loss_func.1} parent=0 // pred_check
    _
  $region15: #{kldiv_loss_func.1} parent=0 // pred_check_branch
    %83 = sbr.rel (0) target = $region17
  $region16: #{kldiv_loss_func.1} parent=0 // pred_region
    _
  $region17: #{kldiv_loss_func.1} parent=0 // pred_fallthru
    _

</llo_original>
